<compile_context>
chip_gen: v6e
topology: v6e:2x2x1
jax: 0.10.0
libtpu: 0.0.40
codegen_flags: <defaults>
</compile_context>

<pallas_src>
import functools

import jax
import jax.numpy as jnp
from jax.experimental import pallas as pl
from jax.experimental.pallas import tpu as pltpu

HIDDEN = 64           # per-tower hidden width (module default)
D = 2 * HIDDEN        # fused actor+critic hidden width == 128 lanes
PREFERRED_TILE_B = 1024


def _round_up(x, m):
    return (x + m - 1) // m * m


def _pick_tile(B):
    """Batch tile: full block for tiny B, else a large, 16-aligned tile that
    still yields >= 2 grid steps (v7x megacore)."""
    if B <= 16:
        return B
    half = _round_up(pl.cdiv(B, 2), 16)
    return max(16, min(PREFERRED_TILE_B, half))


def _tanh_bf16_supported():
    """bf16 EUP/VPU path exists on v6e/v7x; v5e and older bounce through
    converts, so keep f32 tanh there."""
    try:
        kind = jax.devices()[0].device_kind.lower()
    except Exception:
        return False
    return not any(tag in kind for tag in ("v2", "v3", "v4", "v5"))


def actor_critic_kernel(x_ref, w1_ref, b1_ref, w2_ref, b2_ref, w3_ref, b3_ref,
                        out_ref, *, tanh_dtype):
    # x: (TILE_B, S) f32 -> bf16 for the MXU, f32 accumulation throughout.
    x = x_ref[...].astype(jnp.bfloat16)

    # fused fc1 (actor || critic) -> tanh
    z1 = jnp.dot(x, w1_ref[...], preferred_element_type=jnp.float32) + b1_ref[...]
    h1 = jnp.tanh(z1.astype(tanh_dtype)).astype(jnp.bfloat16)

    # fused fc2 (block-diagonal: actor and critic stay independent) -> tanh
    z2 = jnp.dot(h1, w2_ref[...], preferred_element_type=jnp.float32) + b2_ref[...]
    h2 = jnp.tanh(z2.astype(tanh_dtype)).astype(jnp.bfloat16)

    # fused fc3: columns [0:A) = action_mean, column A = value_estimate
    out = jnp.dot(h2, w3_ref[...], preferred_element_type=jnp.float32) + b3_ref[...]
    out_ref[...] = out.astype(out_ref.dtype)


def pack_params(params):
    """Fuse actor+critic weights into lane-dense, bf16 kernel operands."""
    (w1a, b1a, w2a, b2a, w3a, b3a, sigma,
     w1c, b1c, w2c, b2c, w3c, b3c) = params
    S, H = w1a.shape
    A = w3a.shape[1]
    assert 2 * H == D, "fused hidden width must be exactly 128 lanes"

    out_pad = _round_up(A + 1, 128)
    assert A + 1 <= out_pad  # value column always fits

    w1 = jnp.concatenate([w1a, w1c], axis=1)                      # (S, D)
    b1 = jnp.concatenate([b1a, b1c], axis=1)                      # (1, D)

    w2 = jnp.zeros((D, D), jnp.float32)                           # block diag
    w2 = w2.at[:H, :H].set(w2a).at[H:, H:].set(w2c)
    b2 = jnp.concatenate([b2a, b2c], axis=1)                      # (1, D)

    w3 = jnp.zeros((D, out_pad), jnp.float32)
    w3 = w3.at[:H, :A].set(w3a).at[H:, A:A + 1].set(w3c)          # (D, out_pad)
    b3 = jnp.zeros((1, out_pad), jnp.float32)
    b3 = b3.at[:, :A].set(b3a).at[:, A:A + 1].set(b3c)

    packed = (w1.astype(jnp.bfloat16), b1,
              w2.astype(jnp.bfloat16), b2,
              w3.astype(jnp.bfloat16), b3)
    return packed, sigma, A


@functools.partial(jax.jit, static_argnames=("action_space", "tanh_bf16"))
def actor_critic_forward(x, packed, sigma, *, action_space, tanh_bf16=True):
    """Returns (action_mean, sigma, value_estimate)."""
    w1, b1, w2, b2, w3, b3 = packed
    B, S = x.shape
    out_pad = w3.shape[1]

    tile_b = _pick_tile(B)
    grid = (pl.cdiv(B, tile_b),)

    flops = 2 * B * (S * D + D * D + D * out_pad)
    bytes_accessed = (
        x.size * x.dtype.itemsize
        + sum(int(p.size) * p.dtype.itemsize for p in packed)
        + B * out_pad * 2)                       # bf16 output slab
    cost = pl.CostEstimate(flops=flops,
                           transcendentals=2 * B * D,
                           bytes_accessed=bytes_accessed)

    kernel = functools.partial(
        actor_critic_kernel,
        tanh_dtype=jnp.bfloat16 if tanh_bf16 else jnp.float32)

    out = pl.pallas_call(
        kernel,
        out_shape=jax.ShapeDtypeStruct((B, out_pad), jnp.bfloat16),
        grid=grid,
        in_specs=[
            pl.BlockSpec((tile_b, S), lambda i: (i, 0)),       # x
            pl.BlockSpec((S, D), lambda i: (0, 0)),            # w1 (bf16)
            pl.BlockSpec((1, D), lambda i: (0, 0)),            # b1
            pl.BlockSpec((D, D), lambda i: (0, 0)),            # w2 (bf16)
            pl.BlockSpec((1, D), lambda i: (0, 0)),            # b2
            pl.BlockSpec((D, out_pad), lambda i: (0, 0)),      # w3 (bf16)
            pl.BlockSpec((1, out_pad), lambda i: (0, 0)),      # b3
        ],
        out_specs=pl.BlockSpec((tile_b, out_pad), lambda i: (i, 0)),
        compiler_params=pltpu.CompilerParams(
            dimension_semantics=("parallel",)),
        cost_estimate=cost,
    )(x, w1, b1, w2, b2, w3, b3)

    # Slices stay inside this jit so they fuse (no full-slab re-read).
    action_mean = out[:, :action_space].astype(jnp.float32)
    value_estimate = out[:, action_space:action_space + 1].astype(jnp.float32)
    # sigma is x-independent: computed once outside the kernel (hoisted).
    sigma_out = jax.nn.softplus(sigma)
    return action_mean, sigma_out, value_estimate


def init_params(key, state_space, action_space, hidden=HIDDEN, init_sigma=0.5):
    """Mirror torch init: Linear weights ~ N(0,1), biases = 0, sigma = 0.5.
    Weights are stored transposed vs. PyTorch, i.e. (in, out)."""
    ks = jax.random.split(key, 6)

    def lin(k, n_in, n_out):
        return (jax.random.normal(k, (n_in, n_out), jnp.float32),
                jnp.zeros((1, n_out), jnp.float32))

    w1a, b1a = lin(ks[0], state_space, hidden)     # fc1_actor
    w2a, b2a = lin(ks[1], hidden, hidden)          # fc2_actor
    w3a, b3a = lin(ks[2], hidden, action_space)    # fc3_actor_mean
    w1c, b1c = lin(ks[3], state_space, hidden)     # fc1_critic
    w2c, b2c = lin(ks[4], hidden, hidden)          # fc2_critic
    w3c, b3c = lin(ks[5], hidden, 1)               # fc3_value_estimate
    sigma = jnp.full((1, action_space), init_sigma, jnp.float32)
    return (w1a, b1a, w2a, b2a, w3a, b3a, sigma,
            w1c, b1c, w2c, b2c, w3c, b3c)


def _reference(x, params, tanh_dtype):
    """Pure-JAX reference with matching bf16-operand / f32-accum numerics."""
    (w1a, b1a, w2a, b2a, w3a, b3a, s,
     w1c, b1c, w2c, b2c, w3c, b3c) = params
    bf = jnp.bfloat16

    def mm(a, w):
        return jnp.dot(a.astype(bf), w.astype(bf),
                       preferred_element_type=jnp.float32)

    def act(z):
        return jnp.tanh(z.astype(tanh_dtype)).astype(jnp.float32)

    h1a = act(mm(x, w1a) + b1a)
    h2a = act(mm(h1a, w2a) + b2a)
    mean_ref = mm(h2a, w3a) + b3a
    h1c = act(mm(x, w1c) + b1c)
    h2c = act(mm(h1c, w2c) + b2c)
    value_ref = mm(h2c, w3c) + b3c
    sigma_ref = jax.nn.softplus(s)
    return mean_ref, sigma_ref, value_ref


if __name__ == "__main__":
    state_space, action_space = 8, 4
    use_bf16_tanh = _tanh_bf16_supported()
    tanh_dtype = jnp.bfloat16 if use_bf16_tanh else jnp.float32

    key = jax.random.PRNGKey(0)
    k_x, k_x2, k_p = jax.random.split(key, 3)
    params = init_params(k_p, state_space, action_space)
    packed, sigma, _ = pack_params(params)

    # Test 1: tiny batch (single full block, grid=(1,)).
    # Test 2: batch=20 exercises the multi-step grid + masked partial block.
    for k_batch, batch in ((k_x, 4), (k_x2, 20)):
        x = jax.random.normal(k_batch, (batch, state_space), dtype=jnp.float32)

        mean, sig, value = actor_critic_forward(
            x, packed, sigma, action_space=action_space,
            tanh_bf16=use_bf16_tanh)
        jax.block_until_ready((mean, sig, value))

        mean_ref, sigma_ref, value_ref = _reference(x, params, tanh_dtype)

        assert mean.shape == (batch, action_space)
        assert value.shape == (batch, 1)
        assert jnp.allclose(mean, mean_ref, atol=1e-1, rtol=5e-2), \
            f"action_mean mismatch (batch={batch})"
        assert jnp.allclose(value, value_ref, atol=1e-1, rtol=5e-2), \
            f"value mismatch (batch={batch})"
        assert jnp.allclose(sig, sigma_ref, atol=1e-6, rtol=1e-6), \
            f"sigma mismatch (batch={batch})"

    print("KERNEL_OK")
</pallas_src>

<mosaic_0001>
module attributes {stable_mosaic.version = 11 : i64} {
  func.func @actor_critic_kernel(%arg0: i32, %arg1: memref<4x8xf32, #tpu.memory_space<vmem>>, %arg2: memref<8x128xbf16, #tpu.memory_space<vmem>>, %arg3: memref<1x128xf32, #tpu.memory_space<vmem>>, %arg4: memref<128x128xbf16, #tpu.memory_space<vmem>>, %arg5: memref<1x128xf32, #tpu.memory_space<vmem>>, %arg6: memref<128x128xbf16, #tpu.memory_space<vmem>>, %arg7: memref<1x128xf32, #tpu.memory_space<vmem>>, %arg8: memref<4x128xbf16, #tpu.memory_space<vmem>>) attributes {dimension_semantics = [#tpu.dimension_semantics<parallel>], iteration_bounds = array<i64: 1>, scalar_prefetch = 0 : i64, scratch_operands = 0 : i64, tpu.core_type = #tpu.core_type<tc>, window_params = [{transform_indices = @transform_0, window_bounds = array<i64: 4, 8>}, {pipeline_mode = #tpu.pipeline_mode<synchronous>, transform_indices = @transform_1, window_bounds = array<i64: 8, 128>}, {pipeline_mode = #tpu.pipeline_mode<synchronous>, transform_indices = @transform_2, window_bounds = array<i64: 1, 128>}, {pipeline_mode = #tpu.pipeline_mode<synchronous>, transform_indices = @transform_3, window_bounds = array<i64: 128, 128>}, {pipeline_mode = #tpu.pipeline_mode<synchronous>, transform_indices = @transform_4, window_bounds = array<i64: 1, 128>}, {pipeline_mode = #tpu.pipeline_mode<synchronous>, transform_indices = @transform_5, window_bounds = array<i64: 128, 128>}, {pipeline_mode = #tpu.pipeline_mode<synchronous>, transform_indices = @transform_6, window_bounds = array<i64: 1, 128>}, {transform_indices = @transform_7, window_bounds = array<i64: 4, 128>}]} {
    %c0 = arith.constant 0 : index
    %c0_0 = arith.constant 0 : index
    %0 = vector.load %arg1[%c0, %c0_0] : memref<4x8xf32, #tpu.memory_space<vmem>>, vector<4x8xf32>
    %1 = arith.truncf %0 : vector<4x8xf32> to vector<4x8xbf16>
    %c0_1 = arith.constant 0 : index
    %c0_2 = arith.constant 0 : index
    %2 = vector.load %arg2[%c0_1, %c0_2] : memref<8x128xbf16, #tpu.memory_space<vmem>>, vector<8x128xbf16>
    %cst = arith.constant dense<0.000000e+00> : vector<4x128xf32>
    %3 = tpu.matmul %1, %2, %cst {dimension_numbers = #tpu.dot_dimension_numbers<[1], [0], [0], [1], [0, 0, 1, 1], [], []>} : vector<4x8xbf16>, vector<8x128xbf16>, vector<4x128xf32> -> vector<4x128xf32>
    %c0_3 = arith.constant 0 : index
    %c0_4 = arith.constant 0 : index
    %4 = vector.load %arg3[%c0_3, %c0_4] : memref<1x128xf32, #tpu.memory_space<vmem>>, vector<1x128xf32>
    %5 = vector.broadcast %4 : vector<1x128xf32> to vector<4x128xf32>
    %6 = arith.addf %3, %5 : vector<4x128xf32>
    %7 = arith.truncf %6 : vector<4x128xf32> to vector<4x128xbf16>
    %8 = math.tanh %7 : vector<4x128xbf16>
    %c0_5 = arith.constant 0 : index
    %c0_6 = arith.constant 0 : index
    %9 = vector.load %arg4[%c0_5, %c0_6] : memref<128x128xbf16, #tpu.memory_space<vmem>>, vector<128x128xbf16>
    %cst_7 = arith.constant dense<0.000000e+00> : vector<4x128xf32>
    %10 = tpu.matmul %8, %9, %cst_7 {dimension_numbers = #tpu.dot_dimension_numbers<[1], [0], [0], [1], [0, 0, 1, 1], [], []>} : vector<4x128xbf16>, vector<128x128xbf16>, vector<4x128xf32> -> vector<4x128xf32>
    %c0_8 = arith.constant 0 : index
    %c0_9 = arith.constant 0 : index
    %11 = vector.load %arg5[%c0_8, %c0_9] : memref<1x128xf32, #tpu.memory_space<vmem>>, vector<1x128xf32>
    %12 = vector.broadcast %11 : vector<1x128xf32> to vector<4x128xf32>
    %13 = arith.addf %10, %12 : vector<4x128xf32>
    %14 = arith.truncf %13 : vector<4x128xf32> to vector<4x128xbf16>
    %15 = math.tanh %14 : vector<4x128xbf16>
    %c0_10 = arith.constant 0 : index
    %c0_11 = arith.constant 0 : index
    %16 = vector.load %arg6[%c0_10, %c0_11] : memref<128x128xbf16, #tpu.memory_space<vmem>>, vector<128x128xbf16>
    %cst_12 = arith.constant dense<0.000000e+00> : vector<4x128xf32>
    %17 = tpu.matmul %15, %16, %cst_12 {dimension_numbers = #tpu.dot_dimension_numbers<[1], [0], [0], [1], [0, 0, 1, 1], [], []>} : vector<4x128xbf16>, vector<128x128xbf16>, vector<4x128xf32> -> vector<4x128xf32>
    %c0_13 = arith.constant 0 : index
    %c0_14 = arith.constant 0 : index
    %18 = vector.load %arg7[%c0_13, %c0_14] : memref<1x128xf32, #tpu.memory_space<vmem>>, vector<1x128xf32>
    %19 = vector.broadcast %18 : vector<1x128xf32> to vector<4x128xf32>
    %20 = arith.addf %17, %19 : vector<4x128xf32>
    %21 = arith.truncf %20 : vector<4x128xf32> to vector<4x128xbf16>
    %c0_15 = arith.constant 0 : index
    %c0_16 = arith.constant 0 : index
    %22 = vector.load %arg8[%c0_15, %c0_16] : memref<4x128xbf16, #tpu.memory_space<vmem>>, vector<4x128xbf16>
    tpu.vector_store %arg8[%c0_15, %c0_16], %21 {strides = array<i32>} : memref<4x128xbf16, #tpu.memory_space<vmem>>, vector<4x128xbf16>,
    return
  }
  func.func @transform_0(%arg0: i32) -> (i32, i32) {
    %c0_i32 = arith.constant 0 : i32
    %c0_i32_0 = arith.constant 0 : i32
    return %arg0, %c0_i32 : i32, i32
  }
  func.func @transform_1(%arg0: i32) -> (i32, i32) {
    %c0_i32 = arith.constant 0 : i32
    %c0_i32_0 = arith.constant 0 : i32
    %c0_i32_1 = arith.constant 0 : i32
    return %c0_i32, %c0_i32_0 : i32, i32
  }
  func.func @transform_2(%arg0: i32) -> (i32, i32) {
    %c0_i32 = arith.constant 0 : i32
    %c0_i32_0 = arith.constant 0 : i32
    %c0_i32_1 = arith.constant 0 : i32
    return %c0_i32, %c0_i32_0 : i32, i32
  }
  func.func @transform_3(%arg0: i32) -> (i32, i32) {
    %c0_i32 = arith.constant 0 : i32
    %c0_i32_0 = arith.constant 0 : i32
    %c0_i32_1 = arith.constant 0 : i32
    return %c0_i32, %c0_i32_0 : i32, i32
  }
  func.func @transform_4(%arg0: i32) -> (i32, i32) {
    %c0_i32 = arith.constant 0 : i32
    %c0_i32_0 = arith.constant 0 : i32
    %c0_i32_1 = arith.constant 0 : i32
    return %c0_i32, %c0_i32_0 : i32, i32
  }
  func.func @transform_5(%arg0: i32) -> (i32, i32) {
    %c0_i32 = arith.constant 0 : i32
    %c0_i32_0 = arith.constant 0 : i32
    %c0_i32_1 = arith.constant 0 : i32
    return %c0_i32, %c0_i32_0 : i32, i32
  }
  func.func @transform_6(%arg0: i32) -> (i32, i32) {
    %c0_i32 = arith.constant 0 : i32
    %c0_i32_0 = arith.constant 0 : i32
    %c0_i32_1 = arith.constant 0 : i32
    return %c0_i32, %c0_i32_0 : i32, i32
  }
  func.func @transform_7(%arg0: i32) -> (i32, i32) {
    %c0_i32 = arith.constant 0 : i32
    %c0_i32_0 = arith.constant 0 : i32
    return %arg0, %c0_i32 : i32, i32
  }
}

</mosaic_0001>

<llo_original>
// kernel: actor_critic_forward.1
$region0: #{actor_critic_forward.1}
  #allocation0 [shape = 'u32[]', space=smem, size = 0x4, offset = 0x4, fixed_abs, tag = 'smem constant byte address 0x4 - core index']
  #allocation1 [shape = 'u32[144,128]{1,0:T(1,128)}', space=vmem, size = 0x12000, scoped, tag = 'internal scratch']
  %s0 = inlined_call_operand.hbm [shape: f32[4,8], index: 0, kind: input, shape index: {}]
  %s1 = inlined_call_operand.vmem [shape: bf16[8,128], index: 1, kind: input, shape index: {}]
  %s2 = inlined_call_operand.vmem [shape: f32[1,128], index: 2, kind: input, shape index: {}]
  %s3 = inlined_call_operand.hbm [shape: bf16[128,128], index: 3, kind: input, shape index: {}]
  %s4 = inlined_call_operand.vmem [shape: f32[1,128], index: 4, kind: input, shape index: {}]
  %s5 = inlined_call_operand.hbm [shape: bf16[128,128], index: 5, kind: input, shape index: {}]
  %s6 = inlined_call_operand.vmem [shape: f32[1,128], index: 6, kind: input, shape index: {}]
  %s7 = inlined_call_operand.vmem [shape: bf16[4,128], index: 7, kind: output, shape index: {}]
  %s8 = sld [smem:[#allocation0]]
  $region50: #{actor_critic_forward.1} parent=0
    _
  %s10 = ssub.s32 1, %s8
  %s11 = scalar_select 0, %s10, %s8
  $region1: #{actor_critic_forward.1} parent=0
    #allocation2 [shape = 'u8[2048]{0}', space=vmem, size = 0x800, scoped, tag = 'input window, operand 0, single buffered']
    #allocation3 [shape = 's32[1]{0}', space=sflag, size = 0x4, scoped, tag = 'scoped memory for actor_critic_forward.1']
    #allocation4 [shape = 'u8[32768]{0}', space=vmem, size = 0x8000, scoped, tag = 'input window, operand 3, single buffered']
    #allocation5 [shape = 's32[1]{0}', space=sflag, size = 0x4, scoped, tag = 'scoped memory for actor_critic_forward.1']
    #allocation6 [shape = 'u8[32768]{0}', space=vmem, size = 0x8000, scoped, tag = 'input window, operand 5, single buffered']
    %12 = vsyncpa [#allocation3], 0
    %13 = vsyncpa [#allocation5], 0
    // Predicated region
    $region2: #{actor_critic_forward.1} parent=1 // pred_check
      _
    $region3: #{actor_critic_forward.1} parent=1 // pred_check_branch
      %15 = sbr.rel (0) target = $region5
    $region4: #{actor_critic_forward.1} parent=1 // pred_region
      %s17 = ssub.s32 64, 64
      %18 = vsyncadd [#allocation3], %s17
      %s20 = sshll.u32 [#allocation2], 4
      %s21 = int_to_ptr.vmem [resolvable:$true] %s20
      %23 = dma.hbm_to_vmem [thread:$0]  %s0, 64, %s21, [#allocation3]
    $region5: #{actor_critic_forward.1} parent=1 // pred_fallthru
      _
    // Predicated region
    $region6: #{actor_critic_forward.1} parent=1 // pred_check
      _
    $region7: #{actor_critic_forward.1} parent=1 // pred_check_branch
      %25 = sbr.rel (0) target = $region9
    $region8: #{actor_critic_forward.1} parent=1 // pred_region
      _
    $region9: #{actor_critic_forward.1} parent=1 // pred_fallthru
      _
    // Predicated region
    $region10: #{actor_critic_forward.1} parent=1 // pred_check
      _
    $region11: #{actor_critic_forward.1} parent=1 // pred_check_branch
      %27 = sbr.rel (0) target = $region13
    $region12: #{actor_critic_forward.1} parent=1 // pred_region
      _
    $region13: #{actor_critic_forward.1} parent=1 // pred_fallthru
      _
    // Predicated region
    $region14: #{actor_critic_forward.1} parent=1 // pred_check
      _
    $region15: #{actor_critic_forward.1} parent=1 // pred_check_branch
      %29 = sbr.rel (0) target = $region17
    $region16: #{actor_critic_forward.1} parent=1 // pred_region
      %s31 = ssub.s32 1024, 1024
      %32 = vsyncadd [#allocation5], %s31
      %s33 = sshll.u32 [#allocation4], 4
      %s34 = int_to_ptr.vmem [resolvable:$true] %s33
      %39 = dma.hbm_to_vmem [thread:$0]  %s3, 1024, %s34, [#allocation5], 64, 64, 4
    $region17: #{actor_critic_forward.1} parent=1 // pred_fallthru
      _
    // Predicated region
    $region18: #{actor_critic_forward.1} parent=1 // pred_check
      _
    $region19: #{actor_critic_forward.1} parent=1 // pred_check_branch
      %41 = sbr.rel (0) target = $region21
    $region20: #{actor_critic_forward.1} parent=1 // pred_region
      _
    $region21: #{actor_critic_forward.1} parent=1 // pred_fallthru
      _
    // Predicated region
    $region22: #{actor_critic_forward.1} parent=1 // pred_check
      _
    $region23: #{actor_critic_forward.1} parent=1 // pred_check_branch
      %43 = sbr.rel (0) target = $region25
    $region24: #{actor_critic_forward.1} parent=1 // pred_region
      %s45 = ssub.s32 1024, 1024
      %46 = vsyncadd [#allocation5], %s45
      %s47 = sshll.u32 [#allocation6], 4
      %s48 = int_to_ptr.vmem [resolvable:$true] %s47
      %53 = dma.hbm_to_vmem [thread:$0]  %s5, 1024, %s48, [#allocation5], 64, 64, 4
    $region25: #{actor_critic_forward.1} parent=1 // pred_fallthru
      _
    // Predicated region
    $region26: #{actor_critic_forward.1} parent=1 // pred_check
      _
    $region27: #{actor_critic_forward.1} parent=1 // pred_check_branch
      %55 = sbr.rel (0) target = $region29
    $region28: #{actor_critic_forward.1} parent=1 // pred_region
      _
    $region29: #{actor_critic_forward.1} parent=1 // pred_fallthru
      _
    // Predicated region
    $region30: #{actor_critic_forward.1} parent=1 // pred_check
      _
    $region31: #{actor_critic_forward.1} parent=1 // pred_check_branch
      %57 = sbr.rel (0) target = $region33
    $region32: #{actor_critic_forward.1} parent=1 // pred_region
      %58 = dma.done [#allocation3], 64
    $region33: #{actor_critic_forward.1} parent=1 // pred_fallthru
      _
    // Predicated region
    $region34: #{actor_critic_forward.1} parent=1 // pred_check
      _
    $region35: #{actor_critic_forward.1} parent=1 // pred_check_branch
      %60 = sbr.rel (0) target = $region37
    $region36: #{actor_critic_forward.1} parent=1 // pred_region
      %61 = dma.done [#allocation5], 1024
    $region37: #{actor_critic_forward.1} parent=1 // pred_fallthru
      _
    // Predicated region
    $region38: #{actor_critic_forward.1} parent=1 // pred_check
      _
    $region39: #{actor_critic_forward.1} parent=1 // pred_check_branch
      %63 = sbr.rel (0) target = $region41
    $region40: #{actor_critic_forward.1} parent=1 // pred_region
      %64 = dma.done [#allocation5], 1024
    $region41: #{actor_critic_forward.1} parent=1 // pred_fallthru
      _
    %v66 = vld [vmem:[#allocation2] sm:$0xf]
    %v67 = vpack.c.bf16 %v66, %v66
    %v68 = vld [vmem:[%s1] sm:$0xf]
    %v69 = vld [vmem:[%s2] sm:$0x1]
    %v71 = vlaneseq
    %v72 = vshrl.u32 %v71, 7
    %v73 = vsub.s32 0, %v72
    %v74 = vrot.slane %v69, %v73
    %vm76 = vcmask 64512
    %v78 = vsel %vm76, %v67, 0
    %vm80 = vcmask 1043456
    %v82 = vsel %vm80, %v68, 0
    %84 = vmatprep.subr.bf16.mxu0 0
    %85 = vmatpush1.bf16.msra.mxu0 0
    %86 = vmatprep.subr.bf16.mxu0 0
    %87 = vmatpush1.bf16.msra.mxu0 0
    %88 = vmatprep.subr.bf16.mxu0 0
    %89 = vmatpush1.bf16.msra.mxu0 0
    %90 = vmatprep.subr.bf16.mxu0 0
    %91 = vmatpush1.bf16.msra.mxu0 0
    %92 = vmatprep.subr.bf16.mxu0 0
    %93 = vmatpush1.bf16.msra.mxu0 0
    %94 = vmatprep.subr.bf16.mxu0 0
    %95 = vmatpush1.bf16.msra.mxu0 0
    %96 = vmatprep.subr.bf16.mxu0 0
    %97 = vmatpush1.bf16.msra.mxu0 0
    %98 = vmatprep.subr.bf16.mxu0 0
    %99 = vmatpush1.bf16.msra.mxu0 %v82
    %100 = vmatprep.subr.bf16.mxu0 0
    %101 = vmatpush2.bf16.msra.mxu0 0
    %102 = vmatprep.subr.bf16.mxu0 0
    %103 = vmatpush2.bf16.msra.mxu0 0
    %104 = vmatprep.subr.bf16.mxu0 0
    %105 = vmatpush2.bf16.msra.mxu0 0
    %106 = vmatprep.subr.bf16.mxu0 0
    %107 = vmatpush2.bf16.msra.mxu0 0
    %108 = vmatprep.subr.bf16.mxu0 0
    %109 = vmatpush2.bf16.msra.mxu0 0
    %110 = vmatprep.subr.bf16.mxu0 0
    %111 = vmatpush2.bf16.msra.mxu0 0
    %112 = vmatprep.subr.bf16.mxu0 0
    %113 = vmatpush2.bf16.msra.mxu0 0
    %114 = vmatprep.subr.bf16.mxu0 0
    %115 = vmatpush2.bf16.msra.mxu0 0
    %116 = vmatprep.mubr.bf16.mxu0 0
    %117 = vmatmul.mubr.bf16.gmra.mxu0 %v78
    %v118 = vpop.f32.mrf.mxu0
    %v119 = vadd.f32 %v74, %v118
    %v120 = vpop.f32.mrf.mxu0
    %v121 = vpop.f32.mrf.mxu0
    %v122 = vpop.f32.mrf.mxu0
    %123 = vdwg.mxu0
    %v124 = vpack.c.bf16 %v119, %v119
    %v125 = vtanh.bf16.pop %v124
    %v126 = vld [vmem:[#allocation4] sm:$0xf]
    %v127 = vld [vmem:[#allocation4 + $0x4] sm:$0xf]
    %v128 = vld [vmem:[#allocation4 + $0x8] sm:$0xf]
    %v129 = vld [vmem:[#allocation4 + $0xc] sm:$0xf]
    %v130 = vld [vmem:[#allocation4 + $0x10] sm:$0xf]
    %v131 = vld [vmem:[#allocation4 + $0x14] sm:$0xf]
    %v132 = vld [vmem:[#allocation4 + $0x18] sm:$0xf]
    %v133 = vld [vmem:[#allocation4 + $0x1c] sm:$0xf]
    %v134 = vld [vmem:[#allocation4 + $0x20] sm:$0xf]
    %v135 = vld [vmem:[#allocation4 + $0x24] sm:$0xf]
    %v136 = vld [vmem:[#allocation4 + $0x28] sm:$0xf]
    %v137 = vld [vmem:[#allocation4 + $0x2c] sm:$0xf]
    %v138 = vld [vmem:[#allocation4 + $0x30] sm:$0xf]
    %v139 = vld [vmem:[#allocation4 + $0x34] sm:$0xf]
    %v140 = vld [vmem:[#allocation4 + $0x38] sm:$0xf]
    %v141 = vld [vmem:[#allocation4 + $0x3c] sm:$0xf]
    %v142 = vld [vmem:[%s4] sm:$0x1]
    %v144 = vlaneseq
    %v145 = vshrl.u32 %v144, 7
    %v146 = vsub.s32 0, %v145
    %v147 = vrot.slane %v142, %v146
    %v165 = vunpack.c.l.b16 %v126
    %v166 = vunpack.c.l.b16 %v127
    %v167 = vunpack.c.l.b16 %v128
    %v168 = vunpack.c.l.b16 %v129
    %v169 = vunpack.c.l.b16 %v130
    %v170 = vunpack.c.l.b16 %v131
    %v171 = vunpack.c.l.b16 %v132
    %v172 = vunpack.c.l.b16 %v133
    %v173 = vunpack.c.l.b16 %v134
    %v174 = vunpack.c.l.b16 %v135
    %v175 = vunpack.c.l.b16 %v136
    %v176 = vunpack.c.l.b16 %v137
    %v177 = vunpack.c.l.b16 %v138
    %v178 = vunpack.c.l.b16 %v139
    %v179 = vunpack.c.l.b16 %v140
    %v180 = vunpack.c.l.b16 %v141
    %v181 = vpack.c.b16 %v166, %v165
    %v182 = vpack.c.b16 %v168, %v167
    %v183 = vpack.c.b16 %v170, %v169
    %v184 = vpack.c.b16 %v172, %v171
    %v185 = vpack.c.b16 %v174, %v173
    %v186 = vpack.c.b16 %v176, %v175
    %v187 = vpack.c.b16 %v178, %v177
    %v188 = vpack.c.b16 %v180, %v179
    %197 = vmatprep.subr.bf16.mxu0 0
    %198 = vmatpush1.bf16.msra.mxu0 %v188
    %199 = vmatprep.subr.bf16.mxu0 0
    %200 = vmatpush1.bf16.msra.mxu0 %v187
    %201 = vmatprep.subr.bf16.mxu0 0
    %202 = vmatpush1.bf16.msra.mxu0 %v186
    %203 = vmatprep.subr.bf16.mxu0 0
    %204 = vmatpush1.bf16.msra.mxu0 %v185
    %205 = vmatprep.subr.bf16.mxu0 0
    %206 = vmatpush1.bf16.msra.mxu0 %v184
    %207 = vmatprep.subr.bf16.mxu0 0
    %208 = vmatpush1.bf16.msra.mxu0 %v183
    %209 = vmatprep.subr.bf16.mxu0 0
    %210 = vmatpush1.bf16.msra.mxu0 %v182
    %211 = vmatprep.subr.bf16.mxu0 0
    %212 = vmatpush1.bf16.msra.mxu0 %v181
    %213 = vmatprep.subr.bf16.mxu0 0
    %214 = vmatpush2.bf16.msra.mxu0 0
    %215 = vmatprep.subr.bf16.mxu0 0
    %216 = vmatpush2.bf16.msra.mxu0 0
    %217 = vmatprep.subr.bf16.mxu0 0
    %218 = vmatpush2.bf16.msra.mxu0 0
    %219 = vmatprep.subr.bf16.mxu0 0
    %220 = vmatpush2.bf16.msra.mxu0 0
    %221 = vmatprep.subr.bf16.mxu0 0
    %222 = vmatpush2.bf16.msra.mxu0 0
    %223 = vmatprep.subr.bf16.mxu0 0
    %224 = vmatpush2.bf16.msra.mxu0 0
    %225 = vmatprep.subr.bf16.mxu0 0
    %226 = vmatpush2.bf16.msra.mxu0 0
    %227 = vmatprep.subr.bf16.mxu0 0
    %228 = vmatpush2.bf16.msra.mxu0 0
    %229 = vmatprep.mubr.bf16.mxu0 0
    %230 = vmatmul.mubr.bf16.gmra.mxu0 %v125
    %v231 = vpop.f32.mrf.mxu0
    %v232 = vadd.f32 %v147, %v231
    %v233 = vpop.f32.mrf.mxu0
    %v234 = vpop.f32.mrf.mxu0
    %v235 = vpop.f32.mrf.mxu0
    %236 = vdwg.mxu0
    %v237 = vpack.c.bf16 %v232, %v232
    %v238 = vtanh.bf16.pop %v237
    %v239 = vld [vmem:[#allocation6] sm:$0xf]
    %v240 = vld [vmem:[#allocation6 + $0x4] sm:$0xf]
    %v241 = vld [vmem:[#allocation6 + $0x8] sm:$0xf]
    %v242 = vld [vmem:[#allocation6 + $0xc] sm:$0xf]
    %v243 = vld [vmem:[#allocation6 + $0x10] sm:$0xf]
    %v244 = vld [vmem:[#allocation6 + $0x14] sm:$0xf]
    %v245 = vld [vmem:[#allocation6 + $0x18] sm:$0xf]
    %v246 = vld [vmem:[#allocation6 + $0x1c] sm:$0xf]
    %v247 = vld [vmem:[#allocation6 + $0x20] sm:$0xf]
    %v248 = vld [vmem:[#allocation6 + $0x24] sm:$0xf]
    %v249 = vld [vmem:[#allocation6 + $0x28] sm:$0xf]
    %v250 = vld [vmem:[#allocation6 + $0x2c] sm:$0xf]
    %v251 = vld [vmem:[#allocation6 + $0x30] sm:$0xf]
    %v252 = vld [vmem:[#allocation6 + $0x34] sm:$0xf]
    %v253 = vld [vmem:[#allocation6 + $0x38] sm:$0xf]
    %v254 = vld [vmem:[#allocation6 + $0x3c] sm:$0xf]
    %v255 = vld [vmem:[%s6] sm:$0x1]
    %v257 = vlaneseq
    %v258 = vshrl.u32 %v257, 7
    %v259 = vsub.s32 0, %v258
    %v260 = vrot.slane %v255, %v259
    %v278 = vunpack.c.l.b16 %v239
    %v279 = vunpack.c.l.b16 %v240
    %v280 = vunpack.c.l.b16 %v241
    %v281 = vunpack.c.l.b16 %v242
    %v282 = vunpack.c.l.b16 %v243
    %v283 = vunpack.c.l.b16 %v244
    %v284 = vunpack.c.l.b16 %v245
    %v285 = vunpack.c.l.b16 %v246
    %v286 = vunpack.c.l.b16 %v247
    %v287 = vunpack.c.l.b16 %v248
    %v288 = vunpack.c.l.b16 %v249
    %v289 = vunpack.c.l.b16 %v250
    %v290 = vunpack.c.l.b16 %v251
    %v291 = vunpack.c.l.b16 %v252
    %v292 = vunpack.c.l.b16 %v253
    %v293 = vunpack.c.l.b16 %v254
    %v294 = vpack.c.b16 %v279, %v278
    %v295 = vpack.c.b16 %v281, %v280
    %v296 = vpack.c.b16 %v283, %v282
    %v297 = vpack.c.b16 %v285, %v284
    %v298 = vpack.c.b16 %v287, %v286
    %v299 = vpack.c.b16 %v289, %v288
    %v300 = vpack.c.b16 %v291, %v290
    %v301 = vpack.c.b16 %v293, %v292
    %310 = vmatprep.subr.bf16.mxu0 0
    %311 = vmatpush1.bf16.msra.mxu0 %v301
    %312 = vmatprep.subr.bf16.mxu0 0
    %313 = vmatpush1.bf16.msra.mxu0 %v300
    %314 = vmatprep.subr.bf16.mxu0 0
    %315 = vmatpush1.bf16.msra.mxu0 %v299
    %316 = vmatprep.subr.bf16.mxu0 0
    %317 = vmatpush1.bf16.msra.mxu0 %v298
    %318 = vmatprep.subr.bf16.mxu0 0
    %319 = vmatpush1.bf16.msra.mxu0 %v297
    %320 = vmatprep.subr.bf16.mxu0 0
    %321 = vmatpush1.bf16.msra.mxu0 %v296
    %322 = vmatprep.subr.bf16.mxu0 0
    %323 = vmatpush1.bf16.msra.mxu0 %v295
    %324 = vmatprep.subr.bf16.mxu0 0
    %325 = vmatpush1.bf16.msra.mxu0 %v294
    %326 = vmatprep.subr.bf16.mxu0 0
    %327 = vmatpush2.bf16.msra.mxu0 0
    %328 = vmatprep.subr.bf16.mxu0 0
    %329 = vmatpush2.bf16.msra.mxu0 0
    %330 = vmatprep.subr.bf16.mxu0 0
    %331 = vmatpush2.bf16.msra.mxu0 0
    %332 = vmatprep.subr.bf16.mxu0 0
    %333 = vmatpush2.bf16.msra.mxu0 0
    %334 = vmatprep.subr.bf16.mxu0 0
    %335 = vmatpush2.bf16.msra.mxu0 0
    %336 = vmatprep.subr.bf16.mxu0 0
    %337 = vmatpush2.bf16.msra.mxu0 0
    %338 = vmatprep.subr.bf16.mxu0 0
    %339 = vmatpush2.bf16.msra.mxu0 0
    %340 = vmatprep.subr.bf16.mxu0 0
    %341 = vmatpush2.bf16.msra.mxu0 0
    %342 = vmatprep.mubr.bf16.mxu0 0
    %343 = vmatmul.mubr.bf16.gmra.mxu0 %v238
    %v344 = vpop.f32.mrf.mxu0
    %v345 = vadd.f32 %v260, %v344
    %v346 = vpop.f32.mrf.mxu0
    %v347 = vpop.f32.mrf.mxu0
    %v348 = vpop.f32.mrf.mxu0
    %349 = vdwg.mxu0
    %v350 = vpack.c.bf16 %v345, %v345
    %351 = vst [vmem:[%s7] sm:$0x3] %v350
    // Predicated region
    $region42: #{actor_critic_forward.1} parent=1 // pred_check
      _
    $region43: #{actor_critic_forward.1} parent=1 // pred_check_branch
      %353 = sbr.rel (0) target = $region45
    $region44: #{actor_critic_forward.1} parent=1 // pred_region
      _
    $region45: #{actor_critic_forward.1} parent=1 // pred_fallthru
      _
    // Predicated region
    $region46: #{actor_critic_forward.1} parent=1 // pred_check
      _
    $region47: #{actor_critic_forward.1} parent=1 // pred_check_branch
      %355 = sbr.rel (0) target = $region49
    $region48: #{actor_critic_forward.1} parent=1 // pred_region
      _
    $region49: #{actor_critic_forward.1} parent=1 // pred_fallthru
      _
    %356 = vsyncpa [#allocation3], 1
    %357 = vsyncpa [#allocation5], 1

</llo_original>
